<compile_context>
chip_gen: v6e
topology: v6e:2x2x1
jax: 0.10.0
libtpu: 0.0.40
codegen_flags: <defaults>
</compile_context>

<pallas_src>
import jax
import jax.numpy as jnp
from jax.experimental import pallas as pl
from jax.experimental.pallas import tpu as pltpu


LANE = 128
VMEM_TILE_BUDGET = 40 * 1024 * 1024  # double-buffered working set cap (v7x-safe)


def _round_up(v, m):
    return ((v + m - 1) // m) * m


def _sublane(dtype):
    # packed-vreg-friendly sublane multiple per element size
    return {4: 8, 2: 16, 1: 32}.get(jnp.dtype(dtype).itemsize, 8)


def _pick_tile(total, unit, cap):
    """Largest t <= cap with t % unit == 0 and total % t == 0 (total % unit == 0)."""
    t = max(min(cap, total), unit)
    t -= t % unit
    while t > unit and total % t != 0:
        t -= unit
    return max(t, unit)


# ---------------------------------------------------------------------------
# Kernels
# ---------------------------------------------------------------------------

def _hnn_kernel(x_ref, w_ref, b_ref, o_ref):
    # x_ref: (tm, IN)  w_ref: (IN, tn)  (pre-transposed, MXU-native RHS)
    # b_ref: (1, tn)   o_ref: (tm, tn)
    z = jnp.dot(x_ref[...], w_ref[...], preferred_element_type=jnp.float32)
    z = z + b_ref[...]
    # sigmoid(z) = 0.5*tanh(0.5*z) + 0.5 : one EUP op + cheap VALU mul/add.
    o_ref[...] = (0.5 * jnp.tanh(0.5 * z) + 0.5).astype(o_ref.dtype)


def _hnn_kernel_ktiled(x_ref, w_ref, b_ref, o_ref, acc_ref):
    # Same as above but with the IN (contraction) dim tiled on the last grid
    # axis ("arbitrary") and an f32 accumulator in VMEM scratch.
    k = pl.program_id(2)

    @pl.when(k == 0)
    def _():
        acc_ref[...] = jnp.zeros_like(acc_ref)

    acc_ref[...] += jnp.dot(x_ref[...], w_ref[...],
                            preferred_element_type=jnp.float32)

    @pl.when(k == pl.num_programs(2) - 1)
    def _():
        z = acc_ref[...] + b_ref[...]
        o_ref[...] = (0.5 * jnp.tanh(0.5 * z) + 0.5).astype(o_ref.dtype)


# ---------------------------------------------------------------------------
# One-time parameter setup (NOT per forward call)
# ---------------------------------------------------------------------------

def prepare_hnn_params(weight, bias, *, param_dtype=None):
    """weight: (OUT, IN) PyTorch nn.Linear layout; bias: (OUT,).

    Transposes to (IN, OUT), pads OUT to a multiple of 128 (lane-dense
    stores, no masked vst), and optionally casts the weight (e.g. bf16).
    """
    OUT, IN = weight.shape
    OUTp = _round_up(OUT, LANE)
    if param_dtype is not None:
        weight = weight.astype(param_dtype)
    w_t = jnp.transpose(weight)                       # (IN, OUT): K on RHS sublanes
    if OUTp != OUT:
        w_t = jnp.pad(w_t, ((0, 0), (0, OUTp - OUT)))
        bias = jnp.pad(bias, (0, OUTp - OUT))
    b2d = bias.reshape(1, OUTp).astype(jnp.float32)
    return {"w_t": w_t, "b2d": b2d, "out_features": OUT, "in_features": IN}


# ---------------------------------------------------------------------------
# Forward
# ---------------------------------------------------------------------------

def hnn_forward(x, params, *, out_dtype=jnp.float32,
                tm_cap=256, tn_cap=512, tk_cap=2048):
    """sigmoid(x @ weight.T + bias) with params from prepare_hnn_params."""
    w_t, b2d = params["w_t"], params["b2d"]
    OUT, IN = params["out_features"], params["in_features"]
    _, OUTp = w_t.shape
    B, IN_x = x.shape
    assert IN_x == IN, "x last dim must equal in_features"

    x_isz = jnp.dtype(x.dtype).itemsize
    w_isz = jnp.dtype(w_t.dtype).itemsize
    o_isz = jnp.dtype(out_dtype).itemsize

    # dtype-aware batch padding (sublane multiple), tm/tn as divisors.
    sub = _sublane(x.dtype)
    Bp = _round_up(B, sub)
    x_p = x if Bp == B else jnp.pad(x, ((0, Bp - B), (0, 0)))

    tm = _pick_tile(Bp, sub, tm_cap)
    tn = _pick_tile(OUTp, LANE, tn_cap)

    def tile_bytes(tm_, tk_, ktiled_):
        return (2 * (tm_ * tk_ * x_isz + tk_ * tn * w_isz)   # x/w double-buffered
                + 2 * tm_ * tn * o_isz                       # output double-buffered
                + 2 * tn * 4                                 # bias
                + (tm_ * tn * 4 if ktiled_ else 0))          # f32 accumulator

    # Decide K tiling only when the un-tiled-IN working set would blow VMEM.
    ktiled = IN > LANE and tile_bytes(tm, IN, False) > VMEM_TILE_BUDGET
    if ktiled:
        INp = _round_up(IN, LANE)
        tk = _pick_tile(INp, LANE, tk_cap)
        while tk > LANE and tile_bytes(tm, tk, True) > VMEM_TILE_BUDGET:
            tk = _pick_tile(INp, LANE, tk - LANE)
        while tm > sub and tile_bytes(tm, tk, True) > VMEM_TILE_BUDGET:
            tm = _pick_tile(Bp, sub, tm - sub)
        if INp != IN:
            # TODO(synk): fold this IN padding into prepare_hnn_params once the
            # deployment shape (hence tk) is fixed, to avoid a per-call weight copy.
            x_p = jnp.pad(x_p, ((0, 0), (0, INp - IN)))
            w_t = jnp.pad(w_t, ((0, INp - IN), (0, 0)))
    else:
        INp = IN
        tk = IN

    # v7x has 2 TensorCores; "parallel" semantics only shard existing grid
    # points, so avoid collapsing the whole problem into a single (1, 1) tile.
    if Bp // tm == 1 and OUTp // tn == 1:
        if tn % (2 * LANE) == 0:
            tn //= 2
        elif tm % (2 * sub) == 0:
            tm //= 2

    gB, gO, gK = Bp // tm, OUTp // tn, INp // tk

    # HBM-traffic heuristic: the operand mapped to the inner grid axis is
    # re-streamed once per outer step; keep the cheaper re-stream inner.
    w_restream = gB * OUTp * INp * w_isz + Bp * INp * x_isz   # batch outer
    x_restream = gO * Bp * INp * x_isz + OUTp * INp * w_isz   # out outer
    batch_outer = w_restream <= x_restream

    if batch_outer:
        b_of = lambda a, b: a
        o_of = lambda a, b: b
    else:
        b_of = lambda a, b: b
        o_of = lambda a, b: a

    if ktiled:
        grid = (gB, gO, gK) if batch_outer else (gO, gB, gK)
        in_specs = [
            pl.BlockSpec((tm, tk), lambda a, b, k: (b_of(a, b), k)),
            pl.BlockSpec((tk, tn), lambda a, b, k: (k, o_of(a, b))),
            pl.BlockSpec((1, tn),  lambda a, b, k: (0, o_of(a, b))),
        ]
        out_spec = pl.BlockSpec((tm, tn), lambda a, b, k: (b_of(a, b), o_of(a, b)))
        scratch = [pltpu.VMEM((tm, tn), jnp.float32)]
        kernel = _hnn_kernel_ktiled
        dims = ("parallel", "parallel", "arbitrary")
    else:
        grid = (gB, gO) if batch_outer else (gO, gB)
        in_specs = [
            pl.BlockSpec((tm, IN), lambda a, b: (b_of(a, b), 0)),
            pl.BlockSpec((IN, tn), lambda a, b: (0, o_of(a, b))),
            pl.BlockSpec((1, tn),  lambda a, b: (0, o_of(a, b))),
        ]
        out_spec = pl.BlockSpec((tm, tn), lambda a, b: (b_of(a, b), o_of(a, b)))
        scratch = []
        kernel = _hnn_kernel
        dims = ("parallel", "parallel")

    needed = tile_bytes(tm, tk if ktiled else IN, ktiled)
    vmem_limit = int(min(max(needed + (2 << 20), 32 * 1024 * 1024),
                         56 * 1024 * 1024))

    out_p = pl.pallas_call(
        kernel,
        out_shape=jax.ShapeDtypeStruct((Bp, OUTp), out_dtype),
        grid=grid,
        in_specs=in_specs,
        out_specs=out_spec,
        scratch_shapes=scratch,
        compiler_params=pltpu.CompilerParams(
            dimension_semantics=dims,
            vmem_limit_bytes=vmem_limit),
        cost_estimate=pl.CostEstimate(
            flops=2 * Bp * INp * OUTp,
            transcendentals=Bp * OUTp,
            bytes_accessed=Bp * INp * x_isz + INp * OUTp * w_isz + Bp * OUTp * o_isz),
    )(x_p, w_t, b2d)

    return out_p[:B, :OUT]


# ---------------------------------------------------------------------------
# Test
# ---------------------------------------------------------------------------

if __name__ == "__main__":
    # Shapes implied by HNN(inp, outp) with a small batch.
    inp, outp = 32, 64
    batch = 8

    key = jax.random.PRNGKey(0)
    kx, kw, kb = jax.random.split(key, 3)

    # Mimic PyTorch's default uniform(-1/sqrt(inp), 1/sqrt(inp)) init.
    bound = 1.0 / (inp ** 0.5)
    weight = jax.random.uniform(kw, (outp, inp), jnp.float32, -bound, bound)
    bias = jax.random.uniform(kb, (outp,), jnp.float32, -bound, bound)
    x = jax.random.normal(kx, (batch, inp), jnp.float32)

    # One-time parameter setup: transpose to (IN, OUT), pad OUT to a lane
    # multiple, cast weight to bf16 (MXU-native). Not repeated per call.
    params = prepare_hnn_params(weight, bias, param_dtype=jnp.bfloat16)

    out = hnn_forward(x.astype(jnp.bfloat16), params)
    out = jax.block_until_ready(out)

    # Sanity check against pure-JAX f32 reference (tolerance for bf16 operands).
    ref = jax.nn.sigmoid(x @ weight.T + bias)
    assert out.shape == (batch, outp)
    assert jnp.allclose(out, ref, atol=2e-2, rtol=2e-2), float(jnp.max(jnp.abs(out - ref)))

    print("KERNEL_OK")
</pallas_src>

<mosaic_0001>
module attributes {stable_mosaic.version = 11 : i64} {
  func.func @_hnn_kernel(%arg0: i32, %arg1: i32, %arg2: memref<16x32xbf16, #tpu.memory_space<vmem>>, %arg3: memref<32x128xbf16, #tpu.memory_space<vmem>>, %arg4: memref<1x128xf32, #tpu.memory_space<vmem>>, %arg5: memref<16x128xf32, #tpu.memory_space<vmem>>) attributes {dimension_semantics = [#tpu.dimension_semantics<parallel>, #tpu.dimension_semantics<parallel>], iteration_bounds = array<i64: 1, 1>, scalar_prefetch = 0 : i64, scratch_operands = 0 : i64, tpu.core_type = #tpu.core_type<tc>, window_params = [{transform_indices = @transform_0, window_bounds = array<i64: 16, 32>}, {transform_indices = @transform_1, window_bounds = array<i64: 32, 128>}, {transform_indices = @transform_2, window_bounds = array<i64: 1, 128>}, {transform_indices = @transform_3, window_bounds = array<i64: 16, 128>}]} {
    %c0 = arith.constant 0 : index
    %c0_0 = arith.constant 0 : index
    %0 = vector.load %arg2[%c0, %c0_0] : memref<16x32xbf16, #tpu.memory_space<vmem>>, vector<16x32xbf16>
    %c0_1 = arith.constant 0 : index
    %c0_2 = arith.constant 0 : index
    %1 = vector.load %arg3[%c0_1, %c0_2] : memref<32x128xbf16, #tpu.memory_space<vmem>>, vector<32x128xbf16>
    %cst = arith.constant dense<0.000000e+00> : vector<16x128xf32>
    %2 = tpu.matmul %0, %1, %cst {dimension_numbers = #tpu.dot_dimension_numbers<[1], [0], [0], [1], [0, 0, 1, 1], [], []>} : vector<16x32xbf16>, vector<32x128xbf16>, vector<16x128xf32> -> vector<16x128xf32>
    %c0_3 = arith.constant 0 : index
    %c0_4 = arith.constant 0 : index
    %3 = vector.load %arg4[%c0_3, %c0_4] : memref<1x128xf32, #tpu.memory_space<vmem>>, vector<1x128xf32>
    %4 = vector.broadcast %3 : vector<1x128xf32> to vector<16x128xf32>
    %5 = arith.addf %2, %4 : vector<16x128xf32>
    %cst_5 = arith.constant 5.000000e-01 : f32
    %6 = vector.broadcast %cst_5 : f32 to vector<16x128xf32>
    %7 = arith.mulf %6, %5 : vector<16x128xf32>
    %8 = math.tanh %7 : vector<16x128xf32>
    %cst_6 = arith.constant 5.000000e-01 : f32
    %9 = vector.broadcast %cst_6 : f32 to vector<16x128xf32>
    %10 = arith.mulf %9, %8 : vector<16x128xf32>
    %cst_7 = arith.constant 5.000000e-01 : f32
    %11 = vector.broadcast %cst_7 : f32 to vector<16x128xf32>
    %12 = arith.addf %10, %11 : vector<16x128xf32>
    %c0_8 = arith.constant 0 : index
    %c0_9 = arith.constant 0 : index
    %13 = vector.load %arg5[%c0_8, %c0_9] : memref<16x128xf32, #tpu.memory_space<vmem>>, vector<16x128xf32>
    tpu.vector_store %arg5[%c0_8, %c0_9], %12 {strides = array<i32>} : memref<16x128xf32, #tpu.memory_space<vmem>>, vector<16x128xf32>,
    return
  }
  func.func @transform_0(%arg0: i32, %arg1: i32) -> (i32, i32) {
    %c0_i32 = arith.constant 0 : i32
    %c0_i32_0 = arith.constant 0 : i32
    return %arg0, %c0_i32 : i32, i32
  }
  func.func @transform_1(%arg0: i32, %arg1: i32) -> (i32, i32) {
    %c0_i32 = arith.constant 0 : i32
    %c0_i32_0 = arith.constant 0 : i32
    return %c0_i32, %arg1 : i32, i32
  }
  func.func @transform_2(%arg0: i32, %arg1: i32) -> (i32, i32) {
    %c0_i32 = arith.constant 0 : i32
    %c0_i32_0 = arith.constant 0 : i32
    return %c0_i32, %arg1 : i32, i32
  }
  func.func @transform_3(%arg0: i32, %arg1: i32) -> (i32, i32) {
    %c0_i32 = arith.constant 0 : i32
    return %arg0, %arg1 : i32, i32
  }
}

</mosaic_0001>

<llo_original>
// kernel: tpu_custom_call.1
$region0: #{tpu_custom_call.1}
  #allocation0 [shape = 'u32[]', space=smem, size = 0x4, offset = 0x4, fixed_abs, tag = 'smem constant byte address 0x4 - core index']
  #allocation1 [shape = 'u32[144,128]{1,0:T(1,128)}', space=vmem, size = 0x12000, scoped, tag = 'internal scratch']
  %s0 = inlined_call_operand.hbm [shape: bf16[16,32], index: 0, kind: input, shape index: {}]
  %s1 = inlined_call_operand.hbm [shape: bf16[32,128], index: 1, kind: input, shape index: {}]
  %s2 = inlined_call_operand.vmem [shape: f32[1,128], index: 2, kind: input, shape index: {}]
  %s3 = inlined_call_operand.hbm [shape: f32[16,128], index: 3, kind: output, shape index: {}]
  %s4 = sld [smem:[#allocation0]]
  $region30: #{tpu_custom_call.1} parent=0
    _
  %s6 = ssub.s32 1, %s4
  %s7 = scalar_select 0, %s6, %s4
  $region1: #{tpu_custom_call.1} parent=0
    #allocation2 [shape = 'u8[4096]{0}', space=vmem, size = 0x1000, scoped, tag = 'input window, operand 0, single buffered']
    #allocation3 [shape = 's32[1]{0}', space=sflag, size = 0x4, scoped, tag = 'scoped memory for tpu_custom_call.1']
    #allocation4 [shape = 's32[1]{0}', space=sflag, size = 0x4, scoped, tag = 'scoped memory for tpu_custom_call.1']
    #allocation5 [shape = 'u8[8192]{0}', space=vmem, size = 0x2000, scoped, tag = 'input window, operand 1, single buffered']
    #allocation6 [shape = 's32[1]{0}', space=sflag, size = 0x4, scoped, tag = 'scoped memory for tpu_custom_call.1']
    #allocation7 [shape = 'u8[8192]{0}', space=vmem, size = 0x2000, scoped, tag = 'output window, operand 0, single buffered']
    %8 = vsyncpa [#allocation3], 0
    %9 = vsyncpa [#allocation6], 0
    %10 = vsyncpa [#allocation4], 0
    // Predicated region
    $region2: #{tpu_custom_call.1} parent=1 // pred_check
      _
    $region3: #{tpu_custom_call.1} parent=1 // pred_check_branch
      %12 = sbr.rel (0) target = $region5
    $region4: #{tpu_custom_call.1} parent=1 // pred_region
      %s14 = ssub.s32 128, 128
      %15 = vsyncadd [#allocation3], %s14
      %s16 = sshll.u32 [#allocation2], 4
      %s17 = int_to_ptr.vmem [resolvable:$true] %s16
      %22 = dma.hbm_to_vmem [thread:$0]  %s0, 128, %s17, [#allocation3], 64, 64, 4
    $region5: #{tpu_custom_call.1} parent=1 // pred_fallthru
      _
    // Predicated region
    $region6: #{tpu_custom_call.1} parent=1 // pred_check
      _
    $region7: #{tpu_custom_call.1} parent=1 // pred_check_branch
      %24 = sbr.rel (0) target = $region9
    $region8: #{tpu_custom_call.1} parent=1 // pred_region
      %s26 = ssub.s32 256, 256
      %27 = vsyncadd [#allocation6], %s26
      %s28 = sshll.u32 [#allocation5], 4
      %s29 = int_to_ptr.vmem [resolvable:$true] %s28
      %34 = dma.hbm_to_vmem [thread:$0]  %s1, 256, %s29, [#allocation6], 64, 64, 4
    $region9: #{tpu_custom_call.1} parent=1 // pred_fallthru
      _
    // Predicated region
    $region10: #{tpu_custom_call.1} parent=1 // pred_check
      _
    $region11: #{tpu_custom_call.1} parent=1 // pred_check_branch
      %36 = sbr.rel (0) target = $region13
    $region12: #{tpu_custom_call.1} parent=1 // pred_region
      _
    $region13: #{tpu_custom_call.1} parent=1 // pred_fallthru
      _
    // Predicated region
    $region14: #{tpu_custom_call.1} parent=1 // pred_check
      _
    $region15: #{tpu_custom_call.1} parent=1 // pred_check_branch
      %38 = sbr.rel (0) target = $region17
    $region16: #{tpu_custom_call.1} parent=1 // pred_region
      %39 = dma.done [#allocation3], 128
    $region17: #{tpu_custom_call.1} parent=1 // pred_fallthru
      _
    // Predicated region
    $region18: #{tpu_custom_call.1} parent=1 // pred_check
      _
    $region19: #{tpu_custom_call.1} parent=1 // pred_check_branch
      %41 = sbr.rel (0) target = $region21
    $region20: #{tpu_custom_call.1} parent=1 // pred_region
      %42 = dma.done [#allocation6], 256
    $region21: #{tpu_custom_call.1} parent=1 // pred_fallthru
      _
    %v44 = vld [vmem:[#allocation2] sm:$0xf]
    %v45 = vld [vmem:[#allocation2 + $0x4] sm:$0xf]
    %v46 = vld [vmem:[#allocation5] sm:$0xf]
    %v47 = vld [vmem:[#allocation5 + $0x4] sm:$0xf]
    %v48 = vld [vmem:[#allocation5 + $0x8] sm:$0xf]
    %v49 = vld [vmem:[#allocation5 + $0xc] sm:$0xf]
    %v50 = vld [vmem:[%s2] sm:$0x1]
    %v52 = vlaneseq
    %v53 = vshrl.u32 %v52, 7
    %v54 = vsub.s32 0, %v53
    %v55 = vrot.slane %v50, %v54
    %v59 = vunpack.c.l.b16 %v44
    %v60 = vunpack.c.l.b16 %v45
    %v61 = vpack.c.b16 %v60, %v59
    %v66 = vunpack.c.l.b16 %v46
    %v67 = vunpack.c.l.b16 %v47
    %v68 = vunpack.c.l.b16 %v48
    %v69 = vunpack.c.l.b16 %v49
    %v70 = vpack.c.b16 %v67, %v66
    %v71 = vpack.c.b16 %v69, %v68
    %vm74 = vcmask 261120
    %v76 = vsel %vm74, %v61, 0
    %78 = vmatprep.subr.bf16.mxu0 0
    %79 = vmatpush1.bf16.msra.mxu0 0
    %80 = vmatprep.subr.bf16.mxu0 0
    %81 = vmatpush1.bf16.msra.mxu0 0
    %82 = vmatprep.subr.bf16.mxu0 0
    %83 = vmatpush1.bf16.msra.mxu0 0
    %84 = vmatprep.subr.bf16.mxu0 0
    %85 = vmatpush1.bf16.msra.mxu0 0
    %86 = vmatprep.subr.bf16.mxu0 0
    %87 = vmatpush1.bf16.msra.mxu0 0
    %88 = vmatprep.subr.bf16.mxu0 0
    %89 = vmatpush1.bf16.msra.mxu0 0
    %90 = vmatprep.subr.bf16.mxu0 0
    %91 = vmatpush1.bf16.msra.mxu0 %v71
    %92 = vmatprep.subr.bf16.mxu0 0
    %93 = vmatpush1.bf16.msra.mxu0 %v70
    %94 = vmatprep.subr.bf16.mxu0 0
    %95 = vmatpush2.bf16.msra.mxu0 0
    %96 = vmatprep.subr.bf16.mxu0 0
    %97 = vmatpush2.bf16.msra.mxu0 0
    %98 = vmatprep.subr.bf16.mxu0 0
    %99 = vmatpush2.bf16.msra.mxu0 0
    %100 = vmatprep.subr.bf16.mxu0 0
    %101 = vmatpush2.bf16.msra.mxu0 0
    %102 = vmatprep.subr.bf16.mxu0 0
    %103 = vmatpush2.bf16.msra.mxu0 0
    %104 = vmatprep.subr.bf16.mxu0 0
    %105 = vmatpush2.bf16.msra.mxu0 0
    %106 = vmatprep.subr.bf16.mxu0 0
    %107 = vmatpush2.bf16.msra.mxu0 0
    %108 = vmatprep.subr.bf16.mxu0 0
    %109 = vmatpush2.bf16.msra.mxu0 0
    %110 = vmatprep.mubr.bf16.mxu0 0
    %111 = vmatmul.mubr.bf16.gmra.mxu0 %v76
    %v112 = vpop.f32.mrf.mxu0
    %v113 = vadd.f32 %v55, %v112
    %v114 = vpop.f32.mrf.mxu0
    %v115 = vpop.f32.mrf.mxu0
    %v116 = vadd.f32 %v55, %v115
    %v117 = vpop.f32.mrf.mxu0
    %118 = vdwg.mxu0
    %v119 = vmul.f32 %v113, 0.5
    %v120 = vmul.f32 %v116, 0.5
    %v121 = vtanh.pop %v119
    %v122 = vtanh.pop %v120
    %v123 = vmul.f32 %v121, 0.5
    %v124 = vmul.f32 %v122, 0.5
    %v125 = vadd.f32 %v123, 0.5
    %v126 = vadd.f32 %v124, 0.5
    %127 = vst [vmem:[#allocation7] sm:$0xff] %v125
    %128 = vst [vmem:[#allocation7 + $0x8] sm:$0xff] %v126
    // Predicated region
    $region22: #{tpu_custom_call.1} parent=1 // pred_check
      _
    $region23: #{tpu_custom_call.1} parent=1 // pred_check_branch
      %130 = sbr.rel (0) target = $region25
    $region24: #{tpu_custom_call.1} parent=1 // pred_region
      %s132 = ssub.s32 256, 256
      %133 = vsyncadd [#allocation4], %s132
      %s134 = sshll.u32 [#allocation7], 4
      %s135 = int_to_ptr.vmem [resolvable:$true] %s134
      %140 = dma.vmem_to_hbm [thread:$0]  %s135, 256, %s3, [#allocation4], 128, 128, 8
    $region25: #{tpu_custom_call.1} parent=1 // pred_fallthru
      _
    // Predicated region
    $region26: #{tpu_custom_call.1} parent=1 // pred_check
      _
    $region27: #{tpu_custom_call.1} parent=1 // pred_check_branch
      %142 = sbr.rel (0) target = $region29
    $region28: #{tpu_custom_call.1} parent=1 // pred_region
      %143 = dma.done [#allocation4], 256
    $region29: #{tpu_custom_call.1} parent=1 // pred_fallthru
      _
    %144 = vsyncpa [#allocation3], 1
    %145 = vsyncpa [#allocation6], 1
    %146 = vsyncpa [#allocation4], 1

</llo_original>
